<compile_context>
chip_gen: v5e
topology: v5e:2x2
jax: 0.10.0
libtpu: 0.0.40
codegen_flags: <defaults>
</compile_context>

<pallas_src>
import jax
import jax.numpy as jnp
from jax.experimental import pallas as pl
from jax.experimental.pallas import tpu as pltpu


def _round_up(x, m):
    return (x + m - 1) // m * m


def _mlp_kernel(t_ref, n_ref, d_ref, u_ref,
                w1t_ref, w1n_ref, w1d_ref, w1u_ref, b1_ref,
                w2_ref, b2_ref, w3_ref, b3_ref, w4_ref, b4_ref,
                o_ref):
    bf16, f32 = jnp.bfloat16, jnp.float32
    # Layer 1: fused "concat" = four partial matmuls (one per feature piece),
    # all with bf16 MXU operands and f32 accumulation. The bf16 casts happen in
    # VMEM so the HBM inputs stay the original f32 feature arrays.
    h = jnp.dot(t_ref[...].astype(bf16), w1t_ref[...], preferred_element_type=f32)
    h = h + jnp.dot(n_ref[...].astype(bf16), w1n_ref[...], preferred_element_type=f32)
    h = h + jnp.dot(d_ref[...].astype(bf16), w1d_ref[...], preferred_element_type=f32)
    h = h + jnp.dot(u_ref[...].astype(bf16), w1u_ref[...], preferred_element_type=f32)
    h = jnp.maximum(h + b1_ref[...], 0.0)
    # TODO(synk): nn.Dropout is identity in eval mode; training-mode dropout not implemented.
    # Layer 2: (TB, 256) @ (256, 128).
    h = jnp.dot(h.astype(bf16), w2_ref[...], preferred_element_type=f32)
    h = jnp.maximum(h + b2_ref[...], 0.0)
    # Layer 3: (TB, 128) @ (128, 64).
    h = jnp.dot(h.astype(bf16), w3_ref[...], preferred_element_type=f32)
    h = jnp.maximum(h + b3_ref[...], 0.0)
    # Layer 4 (fan_out == 1): VPU multiply + XLU lane reduce; store the result
    # lane-dense as a (1, TB) row (no masked (TB, 1) stores).
    scores = jnp.sum(h * w4_ref[...], axis=-1)            # (TB,)
    o_ref[...] = scores[None, :] + b4_ref[...]             # (1, TB)


def prepare_mlp_params(mlp_params, piece_dims):
    """One-time cast/split of the MLP weights for the kernel.

    Hoisted out of the per-call wrapper so the constant-index weight blocks are
    one-time DMAs (no per-call bf16 re-cast of the weights).
    """
    w1, b1, w2, b2, w3, b3, w4, b4 = mlp_params
    Dt, Dn, Dd, Du = piece_dims
    assert w1.shape[0] == Dt + Dn + Dd + Du
    H1, H2, H3 = w1.shape[1], w2.shape[1], w3.shape[1]
    o1, o2, o3 = Dt, Dt + Dn, Dt + Dn + Dd
    bf16, f32 = jnp.bfloat16, jnp.float32
    return {
        # W1 split into the row blocks matching the four feature pieces.
        "w1t": w1[:o1].astype(bf16),
        "w1n": w1[o1:o2].astype(bf16),
        "w1d": w1[o2:o3].astype(bf16),
        "w1u": w1[o3:].astype(bf16),
        "b1": b1.reshape(1, H1).astype(f32),
        "w2": w2.astype(bf16), "b2": b2.reshape(1, H2).astype(f32),
        "w3": w3.astype(bf16), "b3": b3.reshape(1, H3).astype(f32),
        "w4": w4.reshape(1, H3).astype(f32),   # final layer runs in f32 on the VPU
        "b4": b4.reshape(1, 1).astype(f32),
    }


def combined_score_mlp(title_emb, numerical, domain_emb, user_emb, prep):
    """Run the 4-layer MLP in a single batch-tiled Pallas kernel.

    The four feature pieces are f32 (B, D_piece) arrays; returns (B,) f32.
    """
    B = title_emb.shape[0]
    Dt, Dn, Dd, Du = (title_emb.shape[1], numerical.shape[1],
                      domain_emb.shape[1], user_emb.shape[1])
    H1, H2 = prep["w2"].shape
    H3 = prep["w3"].shape[1]
    assert prep["w1t"].shape == (Dt, H1) and prep["w1u"].shape == (Du, H1)

    # Batch tile: up to 2048 rows, multiple of 16. cdiv(B, 2) keeps at least
    # two balanced tiles for large batches so the "parallel" axis shards across
    # both TensorCores on v7x; small batches collapse to one small tile.
    TB = max(16, min(2048, _round_up(-(-B // 2), 16)))
    B_pad = _round_up(B, TB)
    G = B_pad // TB

    pieces = [title_emb, numerical, domain_emb, user_emb]
    pieces = [p.astype(jnp.float32) for p in pieces]
    if B_pad != B:
        pieces = [jnp.pad(p, ((0, B_pad - B), (0, 0))) for p in pieces]

    row = lambda d: pl.BlockSpec((TB, d), lambda i: (i, 0))          # batch-tiled
    cst = lambda shape: pl.BlockSpec(shape, lambda i: (0, 0))        # VMEM-resident

    flops = 2 * B_pad * ((Dt + Dn + Dd + Du) * H1 + H1 * H2 + H2 * H3 + H3)
    bytes_accessed = (
        B_pad * (Dt + Dn + Dd + Du) * 4
        + 2 * (prep["w1t"].size + prep["w1n"].size + prep["w1d"].size
               + prep["w1u"].size + prep["w2"].size + prep["w3"].size)
        + 4 * (prep["b1"].size + prep["b2"].size + prep["b3"].size
               + prep["w4"].size + prep["b4"].size)
        + B_pad * 4)

    out = pl.pallas_call(
        _mlp_kernel,
        grid=(G,),
        out_shape=jax.ShapeDtypeStruct((G, TB), jnp.float32),
        in_specs=[
            row(Dt), row(Dn), row(Dd), row(Du),
            cst((Dt, H1)), cst((Dn, H1)), cst((Dd, H1)), cst((Du, H1)),
            cst((1, H1)),
            cst((H1, H2)), cst((1, H2)),
            cst((H2, H3)), cst((1, H3)),
            cst((1, H3)), cst((1, 1)),
        ],
        out_specs=pl.BlockSpec((1, TB), lambda i: (i, 0)),
        compiler_params=pltpu.CompilerParams(
            dimension_semantics=("parallel",),       # shard batch tiles across TCs
            vmem_limit_bytes=32 * 1024 * 1024,       # conservative for v7x's 64 MiB
        ),
        cost_estimate=pl.CostEstimate(
            flops=flops, transcendentals=0, bytes_accessed=bytes_accessed),
    )(*pieces,
      prep["w1t"], prep["w1n"], prep["w1d"], prep["w1u"], prep["b1"],
      prep["w2"], prep["b2"], prep["w3"], prep["b3"], prep["w4"], prep["b4"])

    return out.reshape(-1)[:B]


def combined_score_predictor_forward(title_emb, numerical_features, domain_ids,
                                     user_ids, domain_table, user_table, prep):
    # TODO(synk): embedding gathers could be fused into the kernel via
    # PrefetchScalarGridSpec + per-row DMA; kept as plain-JAX takes here.
    domain_emb = jnp.take(domain_table, domain_ids, axis=0)   # (B, 32)
    user_emb = jnp.take(user_table, user_ids, axis=0)         # (B, 64)
    return combined_score_mlp(title_emb, numerical_features, domain_emb,
                              user_emb, prep)                 # (B,)


def init_params(key, n_domains, n_users,
                domain_emb_dim=32, user_emb_dim=64,
                title_emb_dim=200, numerical_dim=5, hidden_dim=256):
    total_input_dim = title_emb_dim + numerical_dim + domain_emb_dim + user_emb_dim
    keys = jax.random.split(key, 10)

    def linear(k, fan_in, fan_out):
        kw, kb = jax.random.split(k)
        bound = 1.0 / jnp.sqrt(fan_in)
        w = jax.random.uniform(kw, (fan_in, fan_out), jnp.float32, -bound, bound)
        b = jax.random.uniform(kb, (1, fan_out), jnp.float32, -bound, bound)
        return w, b

    domain_table = jax.random.normal(keys[0], (n_domains, domain_emb_dim), jnp.float32)
    user_table = jax.random.normal(keys[1], (n_users, user_emb_dim), jnp.float32)
    w1, b1 = linear(keys[2], total_input_dim, hidden_dim)
    w2, b2 = linear(keys[3], hidden_dim, hidden_dim // 2)
    w3, b3 = linear(keys[4], hidden_dim // 2, hidden_dim // 4)
    w4, b4 = linear(keys[5], hidden_dim // 4, 1)
    return domain_table, user_table, (w1, b1, w2, b2, w3, b3, w4, b4)


if __name__ == "__main__":
    key = jax.random.PRNGKey(0)
    B = 8
    n_domains, n_users = 10, 20
    title_emb_dim, numerical_dim = 200, 5
    domain_emb_dim, user_emb_dim = 32, 64

    k_params, k_title, k_num, k_dom, k_usr = jax.random.split(key, 5)
    domain_table, user_table, mlp_params = init_params(
        k_params, n_domains, n_users, domain_emb_dim, user_emb_dim,
        title_emb_dim, numerical_dim)

    # One-time weight preparation (hoisted out of the forward pass).
    prep = prepare_mlp_params(
        mlp_params, (title_emb_dim, numerical_dim, domain_emb_dim, user_emb_dim))

    title_emb = jax.random.normal(k_title, (B, title_emb_dim), jnp.float32)
    numerical_features = jax.random.normal(k_num, (B, numerical_dim), jnp.float32)
    domain_ids = jax.random.randint(k_dom, (B,), 0, n_domains)
    user_ids = jax.random.randint(k_usr, (B,), 0, n_users)

    out = combined_score_predictor_forward(
        title_emb, numerical_features, domain_ids, user_ids,
        domain_table, user_table, prep)
    out = jax.block_until_ready(out)
    assert out.shape == (B,)

    # ---- references ----
    w1, b1, w2, b2, w3, b3, w4, b4 = mlp_params
    d_e = jnp.take(domain_table, domain_ids, axis=0)
    u_e = jnp.take(user_table, user_ids, axis=0)
    o1 = title_emb_dim
    o2 = o1 + numerical_dim
    o3 = o2 + domain_emb_dim
    bf16 = jnp.bfloat16

    # (a) bf16-mirrored reference (same arithmetic as the kernel) — tight check.
    h = (jnp.dot(title_emb.astype(bf16), w1[:o1].astype(bf16),
                 preferred_element_type=jnp.float32)
         + jnp.dot(numerical_features.astype(bf16), w1[o1:o2].astype(bf16),
                   preferred_element_type=jnp.float32)
         + jnp.dot(d_e.astype(bf16), w1[o2:o3].astype(bf16),
                   preferred_element_type=jnp.float32)
         + jnp.dot(u_e.astype(bf16), w1[o3:].astype(bf16),
                   preferred_element_type=jnp.float32))
    h = jnp.maximum(h + b1, 0.0)
    h = jnp.maximum(jnp.dot(h.astype(bf16), w2.astype(bf16),
                            preferred_element_type=jnp.float32) + b2, 0.0)
    h = jnp.maximum(jnp.dot(h.astype(bf16), w3.astype(bf16),
                            preferred_element_type=jnp.float32) + b3, 0.0)
    ref_bf16 = jnp.sum(h * w4.reshape(1, -1), axis=-1) + b4.reshape(-1)

    # (b) full-f32 reference (module semantics, eval-mode dropout) — loose check
    # covering the deliberate bf16 MXU-operand precision choice.
    x = jnp.concatenate([title_emb, numerical_features, d_e, u_e], axis=1)
    h = jnp.maximum(x @ w1 + b1, 0.0)
    h = jnp.maximum(h @ w2 + b2, 0.0)
    h = jnp.maximum(h @ w3 + b3, 0.0)
    ref_f32 = jnp.squeeze(h @ w4 + b4, axis=1)

    assert jnp.allclose(out, ref_bf16, atol=2e-3, rtol=2e-3)
    assert jnp.allclose(out, ref_f32, atol=5e-2, rtol=5e-2)
    print("KERNEL_OK")
</pallas_src>

<mosaic_0001>
module attributes {stable_mosaic.version = 11 : i64} {
  func.func @_mlp_kernel(%arg0: i32, %arg1: memref<16x200xf32, #tpu.memory_space<vmem>>, %arg2: memref<16x5xf32, #tpu.memory_space<vmem>>, %arg3: memref<16x32xf32, #tpu.memory_space<vmem>>, %arg4: memref<16x64xf32, #tpu.memory_space<vmem>>, %arg5: memref<200x256xbf16, #tpu.memory_space<vmem>>, %arg6: memref<5x256xbf16, #tpu.memory_space<vmem>>, %arg7: memref<32x256xbf16, #tpu.memory_space<vmem>>, %arg8: memref<64x256xbf16, #tpu.memory_space<vmem>>, %arg9: memref<1x256xf32, #tpu.memory_space<vmem>>, %arg10: memref<256x128xbf16, #tpu.memory_space<vmem>>, %arg11: memref<1x128xf32, #tpu.memory_space<vmem>>, %arg12: memref<128x64xbf16, #tpu.memory_space<vmem>>, %arg13: memref<1x64xf32, #tpu.memory_space<vmem>>, %arg14: memref<1x64xf32, #tpu.memory_space<vmem>>, %arg15: memref<1x1xf32, #tpu.memory_space<vmem>>, %arg16: memref<1x16xf32, #tpu.memory_space<vmem>>) attributes {dimension_semantics = [#tpu.dimension_semantics<parallel>], iteration_bounds = array<i64: 1>, scalar_prefetch = 0 : i64, scratch_operands = 0 : i64, tpu.core_type = #tpu.core_type<tc>, window_params = [{transform_indices = @transform_0, window_bounds = array<i64: 16, 200>}, {transform_indices = @transform_1, window_bounds = array<i64: 16, 5>}, {transform_indices = @transform_2, window_bounds = array<i64: 16, 32>}, {transform_indices = @transform_3, window_bounds = array<i64: 16, 64>}, {pipeline_mode = #tpu.pipeline_mode<synchronous>, transform_indices = @transform_4, window_bounds = array<i64: 200, 256>}, {pipeline_mode = #tpu.pipeline_mode<synchronous>, transform_indices = @transform_5, window_bounds = array<i64: 5, 256>}, {pipeline_mode = #tpu.pipeline_mode<synchronous>, transform_indices = @transform_6, window_bounds = array<i64: 32, 256>}, {pipeline_mode = #tpu.pipeline_mode<synchronous>, transform_indices = @transform_7, window_bounds = array<i64: 64, 256>}, {pipeline_mode = #tpu.pipeline_mode<synchronous>, transform_indices = @transform_8, window_bounds = array<i64: 1, 256>}, {pipeline_mode = #tpu.pipeline_mode<synchronous>, transform_indices = @transform_9, window_bounds = array<i64: 256, 128>}, {pipeline_mode = #tpu.pipeline_mode<synchronous>, transform_indices = @transform_10, window_bounds = array<i64: 1, 128>}, {pipeline_mode = #tpu.pipeline_mode<synchronous>, transform_indices = @transform_11, window_bounds = array<i64: 128, 64>}, {pipeline_mode = #tpu.pipeline_mode<synchronous>, transform_indices = @transform_12, window_bounds = array<i64: 1, 64>}, {pipeline_mode = #tpu.pipeline_mode<synchronous>, transform_indices = @transform_13, window_bounds = array<i64: 1, 64>}, {pipeline_mode = #tpu.pipeline_mode<synchronous>, transform_indices = @transform_14, window_bounds = array<i64: 1, 1>}, {transform_indices = @transform_15, window_bounds = array<i64: 1, 16>}]} {
    %c0 = arith.constant 0 : index
    %c0_0 = arith.constant 0 : index
    %0 = vector.load %arg1[%c0, %c0_0] : memref<16x200xf32, #tpu.memory_space<vmem>>, vector<16x200xf32>
    %1 = arith.truncf %0 : vector<16x200xf32> to vector<16x200xbf16>
    %c0_1 = arith.constant 0 : index
    %c0_2 = arith.constant 0 : index
    %2 = vector.load %arg5[%c0_1, %c0_2] : memref<200x256xbf16, #tpu.memory_space<vmem>>, vector<200x256xbf16>
    %cst = arith.constant dense<0.000000e+00> : vector<16x256xf32>
    %3 = tpu.matmul %1, %2, %cst {dimension_numbers = #tpu.dot_dimension_numbers<[1], [0], [0], [1], [0, 0, 1, 1], [], []>} : vector<16x200xbf16>, vector<200x256xbf16>, vector<16x256xf32> -> vector<16x256xf32>
    %c0_3 = arith.constant 0 : index
    %c0_4 = arith.constant 0 : index
    %4 = vector.load %arg2[%c0_3, %c0_4] : memref<16x5xf32, #tpu.memory_space<vmem>>, vector<16x5xf32>
    %5 = arith.truncf %4 : vector<16x5xf32> to vector<16x5xbf16>
    %c0_5 = arith.constant 0 : index
    %c0_6 = arith.constant 0 : index
    %6 = vector.load %arg6[%c0_5, %c0_6] : memref<5x256xbf16, #tpu.memory_space<vmem>>, vector<5x256xbf16>
    %cst_7 = arith.constant dense<0.000000e+00> : vector<16x256xf32>
    %7 = tpu.matmul %5, %6, %cst_7 {dimension_numbers = #tpu.dot_dimension_numbers<[1], [0], [0], [1], [0, 0, 1, 1], [], []>} : vector<16x5xbf16>, vector<5x256xbf16>, vector<16x256xf32> -> vector<16x256xf32>
    %8 = arith.addf %3, %7 : vector<16x256xf32>
    %c0_8 = arith.constant 0 : index
    %c0_9 = arith.constant 0 : index
    %9 = vector.load %arg3[%c0_8, %c0_9] : memref<16x32xf32, #tpu.memory_space<vmem>>, vector<16x32xf32>
    %10 = arith.truncf %9 : vector<16x32xf32> to vector<16x32xbf16>
    %c0_10 = arith.constant 0 : index
    %c0_11 = arith.constant 0 : index
    %11 = vector.load %arg7[%c0_10, %c0_11] : memref<32x256xbf16, #tpu.memory_space<vmem>>, vector<32x256xbf16>
    %cst_12 = arith.constant dense<0.000000e+00> : vector<16x256xf32>
    %12 = tpu.matmul %10, %11, %cst_12 {dimension_numbers = #tpu.dot_dimension_numbers<[1], [0], [0], [1], [0, 0, 1, 1], [], []>} : vector<16x32xbf16>, vector<32x256xbf16>, vector<16x256xf32> -> vector<16x256xf32>
    %13 = arith.addf %8, %12 : vector<16x256xf32>
    %c0_13 = arith.constant 0 : index
    %c0_14 = arith.constant 0 : index
    %14 = vector.load %arg4[%c0_13, %c0_14] : memref<16x64xf32, #tpu.memory_space<vmem>>, vector<16x64xf32>
    %15 = arith.truncf %14 : vector<16x64xf32> to vector<16x64xbf16>
    %c0_15 = arith.constant 0 : index
    %c0_16 = arith.constant 0 : index
    %16 = vector.load %arg8[%c0_15, %c0_16] : memref<64x256xbf16, #tpu.memory_space<vmem>>, vector<64x256xbf16>
    %cst_17 = arith.constant dense<0.000000e+00> : vector<16x256xf32>
    %17 = tpu.matmul %15, %16, %cst_17 {dimension_numbers = #tpu.dot_dimension_numbers<[1], [0], [0], [1], [0, 0, 1, 1], [], []>} : vector<16x64xbf16>, vector<64x256xbf16>, vector<16x256xf32> -> vector<16x256xf32>
    %18 = arith.addf %13, %17 : vector<16x256xf32>
    %c0_18 = arith.constant 0 : index
    %c0_19 = arith.constant 0 : index
    %19 = vector.load %arg9[%c0_18, %c0_19] : memref<1x256xf32, #tpu.memory_space<vmem>>, vector<1x256xf32>
    %20 = vector.broadcast %19 : vector<1x256xf32> to vector<16x256xf32>
    %21 = arith.addf %18, %20 : vector<16x256xf32>
    %cst_20 = arith.constant 0.000000e+00 : f32
    %22 = vector.broadcast %cst_20 : f32 to vector<16x256xf32>
    %23 = arith.maximumf %21, %22 : vector<16x256xf32>
    %24 = arith.truncf %23 : vector<16x256xf32> to vector<16x256xbf16>
    %c0_21 = arith.constant 0 : index
    %c0_22 = arith.constant 0 : index
    %25 = vector.load %arg10[%c0_21, %c0_22] : memref<256x128xbf16, #tpu.memory_space<vmem>>, vector<256x128xbf16>
    %cst_23 = arith.constant dense<0.000000e+00> : vector<16x128xf32>
    %26 = tpu.matmul %24, %25, %cst_23 {dimension_numbers = #tpu.dot_dimension_numbers<[1], [0], [0], [1], [0, 0, 1, 1], [], []>} : vector<16x256xbf16>, vector<256x128xbf16>, vector<16x128xf32> -> vector<16x128xf32>
    %c0_24 = arith.constant 0 : index
    %c0_25 = arith.constant 0 : index
    %27 = vector.load %arg11[%c0_24, %c0_25] : memref<1x128xf32, #tpu.memory_space<vmem>>, vector<1x128xf32>
    %28 = vector.broadcast %27 : vector<1x128xf32> to vector<16x128xf32>
    %29 = arith.addf %26, %28 : vector<16x128xf32>
    %cst_26 = arith.constant 0.000000e+00 : f32
    %30 = vector.broadcast %cst_26 : f32 to vector<16x128xf32>
    %31 = arith.maximumf %29, %30 : vector<16x128xf32>
    %32 = arith.truncf %31 : vector<16x128xf32> to vector<16x128xbf16>
    %c0_27 = arith.constant 0 : index
    %c0_28 = arith.constant 0 : index
    %33 = vector.load %arg12[%c0_27, %c0_28] : memref<128x64xbf16, #tpu.memory_space<vmem>>, vector<128x64xbf16>
    %cst_29 = arith.constant dense<0.000000e+00> : vector<16x64xf32>
    %34 = tpu.matmul %32, %33, %cst_29 {dimension_numbers = #tpu.dot_dimension_numbers<[1], [0], [0], [1], [0, 0, 1, 1], [], []>} : vector<16x128xbf16>, vector<128x64xbf16>, vector<16x64xf32> -> vector<16x64xf32>
    %c0_30 = arith.constant 0 : index
    %c0_31 = arith.constant 0 : index
    %35 = vector.load %arg13[%c0_30, %c0_31] : memref<1x64xf32, #tpu.memory_space<vmem>>, vector<1x64xf32>
    %36 = vector.broadcast %35 : vector<1x64xf32> to vector<16x64xf32>
    %37 = arith.addf %34, %36 : vector<16x64xf32>
    %cst_32 = arith.constant 0.000000e+00 : f32
    %38 = vector.broadcast %cst_32 : f32 to vector<16x64xf32>
    %39 = arith.maximumf %37, %38 : vector<16x64xf32>
    %c0_33 = arith.constant 0 : index
    %c0_34 = arith.constant 0 : index
    %40 = vector.load %arg14[%c0_33, %c0_34] : memref<1x64xf32, #tpu.memory_space<vmem>>, vector<1x64xf32>
    %41 = vector.broadcast %40 : vector<1x64xf32> to vector<16x64xf32>
    %42 = arith.mulf %39, %41 : vector<16x64xf32>
    %cst_35 = arith.constant dense<0.000000e+00> : vector<16xf32>
    %43 = vector.multi_reduction <add>, %42, %cst_35 [1] : vector<16x64xf32> to vector<16xf32>
    %44 = vector.shape_cast %43 : vector<16xf32> to vector<1x16xf32>
    %c0_36 = arith.constant 0 : index
    %c0_37 = arith.constant 0 : index
    %45 = vector.load %arg15[%c0_36, %c0_37] : memref<1x1xf32, #tpu.memory_space<vmem>>, vector<1x1xf32>
    %46 = vector.broadcast %45 : vector<1x1xf32> to vector<1x16xf32>
    %47 = arith.addf %44, %46 : vector<1x16xf32>
    %c0_38 = arith.constant 0 : index
    %c0_39 = arith.constant 0 : index
    %48 = vector.load %arg16[%c0_38, %c0_39] : memref<1x16xf32, #tpu.memory_space<vmem>>, vector<1x16xf32>
    tpu.vector_store %arg16[%c0_38, %c0_39], %47 {strides = array<i32>} : memref<1x16xf32, #tpu.memory_space<vmem>>, vector<1x16xf32>,
    return
  }
  func.func @transform_0(%arg0: i32) -> (i32, i32) {
    %c0_i32 = arith.constant 0 : i32
    %c0_i32_0 = arith.constant 0 : i32
    return %arg0, %c0_i32 : i32, i32
  }
  func.func @transform_1(%arg0: i32) -> (i32, i32) {
    %c0_i32 = arith.constant 0 : i32
    %c0_i32_0 = arith.constant 0 : i32
    return %arg0, %c0_i32 : i32, i32
  }
  func.func @transform_2(%arg0: i32) -> (i32, i32) {
    %c0_i32 = arith.constant 0 : i32
    %c0_i32_0 = arith.constant 0 : i32
    return %arg0, %c0_i32 : i32, i32
  }
  func.func @transform_3(%arg0: i32) -> (i32, i32) {
    %c0_i32 = arith.constant 0 : i32
    %c0_i32_0 = arith.constant 0 : i32
    return %arg0, %c0_i32 : i32, i32
  }
  func.func @transform_4(%arg0: i32) -> (i32, i32) {
    %c0_i32 = arith.constant 0 : i32
    %c0_i32_0 = arith.constant 0 : i32
    %c0_i32_1 = arith.constant 0 : i32
    return %c0_i32, %c0_i32_0 : i32, i32
  }
  func.func @transform_5(%arg0: i32) -> (i32, i32) {
    %c0_i32 = arith.constant 0 : i32
    %c0_i32_0 = arith.constant 0 : i32
    %c0_i32_1 = arith.constant 0 : i32
    return %c0_i32, %c0_i32_0 : i32, i32
  }
  func.func @transform_6(%arg0: i32) -> (i32, i32) {
    %c0_i32 = arith.constant 0 : i32
    %c0_i32_0 = arith.constant 0 : i32
    %c0_i32_1 = arith.constant 0 : i32
    return %c0_i32, %c0_i32_0 : i32, i32
  }
  func.func @transform_7(%arg0: i32) -> (i32, i32) {
    %c0_i32 = arith.constant 0 : i32
    %c0_i32_0 = arith.constant 0 : i32
    %c0_i32_1 = arith.constant 0 : i32
    return %c0_i32, %c0_i32_0 : i32, i32
  }
  func.func @transform_8(%arg0: i32) -> (i32, i32) {
    %c0_i32 = arith.constant 0 : i32
    %c0_i32_0 = arith.constant 0 : i32
    %c0_i32_1 = arith.constant 0 : i32
    return %c0_i32, %c0_i32_0 : i32, i32
  }
  func.func @transform_9(%arg0: i32) -> (i32, i32) {
    %c0_i32 = arith.constant 0 : i32
    %c0_i32_0 = arith.constant 0 : i32
    %c0_i32_1 = arith.constant 0 : i32
    return %c0_i32, %c0_i32_0 : i32, i32
  }
  func.func @transform_10(%arg0: i32) -> (i32, i32) {
    %c0_i32 = arith.constant 0 : i32
    %c0_i32_0 = arith.constant 0 : i32
    %c0_i32_1 = arith.constant 0 : i32
    return %c0_i32, %c0_i32_0 : i32, i32
  }
  func.func @transform_11(%arg0: i32) -> (i32, i32) {
    %c0_i32 = arith.constant 0 : i32
    %c0_i32_0 = arith.constant 0 : i32
    %c0_i32_1 = arith.constant 0 : i32
    return %c0_i32, %c0_i32_0 : i32, i32
  }
  func.func @transform_12(%arg0: i32) -> (i32, i32) {
    %c0_i32 = arith.constant 0 : i32
    %c0_i32_0 = arith.constant 0 : i32
    %c0_i32_1 = arith.constant 0 : i32
    return %c0_i32, %c0_i32_0 : i32, i32
  }
  func.func @transform_13(%arg0: i32) -> (i32, i32) {
    %c0_i32 = arith.constant 0 : i32
    %c0_i32_0 = arith.constant 0 : i32
    %c0_i32_1 = arith.constant 0 : i32
    return %c0_i32, %c0_i32_0 : i32, i32
  }
  func.func @transform_14(%arg0: i32) -> (i32, i32) {
    %c0_i32 = arith.constant 0 : i32
    %c0_i32_0 = arith.constant 0 : i32
    %c0_i32_1 = arith.constant 0 : i32
    return %c0_i32, %c0_i32_0 : i32, i32
  }
  func.func @transform_15(%arg0: i32) -> (i32, i32) {
    %c0_i32 = arith.constant 0 : i32
    %c0_i32_0 = arith.constant 0 : i32
    return %arg0, %c0_i32 : i32, i32
  }
}

</mosaic_0001>

<llo_original>
// kernel: tpu_custom_call.1
$region0: #{tpu_custom_call.1}
  #allocation0 [shape = 'u32[]', space=smem, size = 0x4, offset = 0x4, fixed_abs, tag = 'smem constant byte address 0x4 - core index']
  #allocation1 [shape = 'u32[72,128]{1,0:T(1,128)}', space=vmem, size = 0x9000, scoped, tag = 'internal scratch']
  #allocation2 [shape = 'f32[1,1]{1,0:T(1,128)S(1)}', space=vmem, size = 0x200, scoped, tag = 'scoped memory for tpu_custom_call.1']
  %s0 = inlined_call_operand.hbm [shape: f32[16,200], index: 0, kind: input, shape index: {}]
  %s1 = inlined_call_operand.vmem [shape: f32[16,5], index: 1, kind: input, shape index: {}]
  %s2 = inlined_call_operand.hbm [shape: f32[16,32], index: 2, kind: input, shape index: {}]
  %s3 = inlined_call_operand.hbm [shape: f32[16,64], index: 3, kind: input, shape index: {}]
  %s4 = inlined_call_operand.hbm [shape: bf16[200,256], index: 4, kind: input, shape index: {}]
  %s5 = inlined_call_operand.hbm [shape: bf16[5,256], index: 5, kind: input, shape index: {}]
  %s6 = inlined_call_operand.hbm [shape: bf16[32,256], index: 6, kind: input, shape index: {}]
  %s7 = inlined_call_operand.hbm [shape: bf16[64,256], index: 7, kind: input, shape index: {}]
  %s8 = inlined_call_operand.vmem [shape: f32[1,256], index: 8, kind: input, shape index: {}]
  %s9 = inlined_call_operand.vmem [shape: bf16[256,128], index: 9, kind: input, shape index: {}]
  %s10 = inlined_call_operand.vmem [shape: f32[1,128], index: 10, kind: input, shape index: {}]
  %s11 = inlined_call_operand.vmem [shape: bf16[128,64], index: 11, kind: input, shape index: {}]
  %s12 = inlined_call_operand.vmem [shape: f32[1,64], index: 12, kind: input, shape index: {}]
  %s13 = inlined_call_operand.vmem [shape: f32[1,64], index: 13, kind: input, shape index: {}]
  %s14 = inlined_call_operand.<no memory space> [shape: f32[1,1], index: 14, kind: input, shape index: {}]
  %s15 = inlined_call_operand.hbm [shape: f32[1,16], index: 15, kind: output, shape index: {}]
  %s16 = sld [smem:[#allocation0]]
  $region98: #{tpu_custom_call.1} parent=0
    _
  %s18 = ssub.s32 1, %s16
  %s19 = scalar_select 0, %s18, %s16
  %v20 = vstv %s14
  %21 = vst [vmem:[#allocation2] sm:$0x1] %v20
  $region1: #{tpu_custom_call.1} parent=0
    #allocation3 [shape = 'u8[16384]{0}', space=vmem, size = 0x4000, scoped, tag = 'input window, operand 0, single buffered']
    #allocation4 [shape = 's32[1]{0}', space=sflag, size = 0x4, scoped, tag = 'scoped memory for tpu_custom_call.1']
    #allocation5 [shape = 's32[1]{0}', space=sflag, size = 0x4, scoped, tag = 'scoped memory for tpu_custom_call.1']
    #allocation6 [shape = 'u8[8192]{0}', space=vmem, size = 0x2000, scoped, tag = 'input window, operand 2, single buffered']
    #allocation7 [shape = 's32[1]{0}', space=sflag, size = 0x4, scoped, tag = 'scoped memory for tpu_custom_call.1']
    #allocation8 [shape = 'u8[8192]{0}', space=vmem, size = 0x2000, scoped, tag = 'input window, operand 3, single buffered']
    #allocation9 [shape = 'u8[102400]{0}', space=vmem, size = 0x19000, scoped, tag = 'input window, operand 4, single buffered']
    #allocation10 [shape = 's32[1]{0}', space=sflag, size = 0x4, scoped, tag = 'scoped memory for tpu_custom_call.1']
    #allocation11 [shape = 'u8[4096]{0}', space=vmem, size = 0x1000, scoped, tag = 'input window, operand 5, single buffered']
    #allocation12 [shape = 'u8[16384]{0}', space=vmem, size = 0x4000, scoped, tag = 'input window, operand 6, single buffered']
    #allocation13 [shape = 's32[1]{0}', space=sflag, size = 0x4, scoped, tag = 'scoped memory for tpu_custom_call.1']
    #allocation14 [shape = 'u8[32768]{0}', space=vmem, size = 0x8000, scoped, tag = 'input window, operand 7, single buffered']
    #allocation15 [shape = 'u8[512]{0}', space=vmem, size = 0x400, scoped, tag = 'output window, operand 0, single buffered']
    %22 = vsyncpa [#allocation4], 0
    %23 = vsyncpa [#allocation7], 0
    %24 = vsyncpa [#allocation10], 0
    %25 = vsyncpa [#allocation13], 0
    %26 = vsyncpa [#allocation5], 0
    // Predicated region
    $region2: #{tpu_custom_call.1} parent=1 // pred_check
      _
    $region3: #{tpu_custom_call.1} parent=1 // pred_check_branch
      %28 = sbr.rel (0) target = $region5
    $region4: #{tpu_custom_call.1} parent=1 // pred_region
      %30 = vsyncadd [#allocation4], 0
      %s31 = sshll.u32 %s0, 4
      %s32 = int_to_ptr.hbm [resolvable:$true] %s31
      %s33 = sshll.u32 [#allocation3], 4
      %s34 = int_to_ptr.vmem [resolvable:$true] %s33
      %39 = dma.hbm_to_vmem [thread:$0]  %s32, 512, %s34, [#allocation4], 256, 256, 16
    $region5: #{tpu_custom_call.1} parent=1 // pred_fallthru
      _
    // Predicated region
    $region6: #{tpu_custom_call.1} parent=1 // pred_check
      _
    $region7: #{tpu_custom_call.1} parent=1 // pred_check_branch
      %41 = sbr.rel (0) target = $region9
    $region8: #{tpu_custom_call.1} parent=1 // pred_region
      _
    $region9: #{tpu_custom_call.1} parent=1 // pred_fallthru
      _
    // Predicated region
    $region10: #{tpu_custom_call.1} parent=1 // pred_check
      _
    $region11: #{tpu_custom_call.1} parent=1 // pred_check_branch
      %43 = sbr.rel (0) target = $region13
    $region12: #{tpu_custom_call.1} parent=1 // pred_region
      %45 = vsyncadd [#allocation7], 0
      %s46 = sshll.u32 %s2, 4
      %s47 = int_to_ptr.hbm [resolvable:$true] %s46
      %s48 = sshll.u32 [#allocation6], 4
      %s49 = int_to_ptr.vmem [resolvable:$true] %s48
      %54 = dma.hbm_to_vmem [thread:$0]  %s47, 256, %s49, [#allocation7], 128, 128, 8
    $region13: #{tpu_custom_call.1} parent=1 // pred_fallthru
      _
    // Predicated region
    $region14: #{tpu_custom_call.1} parent=1 // pred_check
      _
    $region15: #{tpu_custom_call.1} parent=1 // pred_check_branch
      %56 = sbr.rel (0) target = $region17
    $region16: #{tpu_custom_call.1} parent=1 // pred_region
      %58 = vsyncadd [#allocation7], 0
      %s59 = sshll.u32 %s3, 4
      %s60 = int_to_ptr.hbm [resolvable:$true] %s59
      %s61 = sshll.u32 [#allocation8], 4
      %s62 = int_to_ptr.vmem [resolvable:$true] %s61
      %67 = dma.hbm_to_vmem [thread:$0]  %s60, 256, %s62, [#allocation7], 128, 128, 8
    $region17: #{tpu_custom_call.1} parent=1 // pred_fallthru
      _
    // Predicated region
    $region18: #{tpu_custom_call.1} parent=1 // pred_check
      _
    $region19: #{tpu_custom_call.1} parent=1 // pred_check_branch
      %69 = sbr.rel (0) target = $region21
    $region20: #{tpu_custom_call.1} parent=1 // pred_region
      %71 = vsyncadd [#allocation10], 0
      %s72 = sshll.u32 %s4, 4
      %s73 = int_to_ptr.hbm [resolvable:$true] %s72
      %s74 = sshll.u32 [#allocation9], 4
      %s75 = int_to_ptr.vmem [resolvable:$true] %s74
      %80 = dma.hbm_to_vmem [thread:$0]  %s73, 3200, %s75, [#allocation10], 128, 128, 8
    $region21: #{tpu_custom_call.1} parent=1 // pred_fallthru
      _
    // Predicated region
    $region22: #{tpu_custom_call.1} parent=1 // pred_check
      _
    $region23: #{tpu_custom_call.1} parent=1 // pred_check_branch
      %82 = sbr.rel (0) target = $region25
    $region24: #{tpu_custom_call.1} parent=1 // pred_region
      %84 = vsyncadd [#allocation10], 0
      %s86 = sshll.u32 %s5, 4
      %s87 = int_to_ptr.hbm [resolvable:$true] %s86
      %s88 = sshll.u32 [#allocation11], 4
      %s89 = int_to_ptr.vmem [resolvable:$true] %s88
      %91 = dma.hbm_to_vmem [thread:$0]  %s87, 128, %s89, [#allocation10]
    $region25: #{tpu_custom_call.1} parent=1 // pred_fallthru
      _
    // Predicated region
    $region26: #{tpu_custom_call.1} parent=1 // pred_check
      _
    $region27: #{tpu_custom_call.1} parent=1 // pred_check_branch
      %93 = sbr.rel (0) target = $region29
    $region28: #{tpu_custom_call.1} parent=1 // pred_region
      %95 = vsyncadd [#allocation13], 0
      %s96 = sshll.u32 %s6, 4
      %s97 = int_to_ptr.hbm [resolvable:$true] %s96
      %s98 = sshll.u32 [#allocation12], 4
      %s99 = int_to_ptr.vmem [resolvable:$true] %s98
      %104 = dma.hbm_to_vmem [thread:$0]  %s97, 512, %s99, [#allocation13], 128, 128, 8
    $region29: #{tpu_custom_call.1} parent=1 // pred_fallthru
      _
    // Predicated region
    $region30: #{tpu_custom_call.1} parent=1 // pred_check
      _
    $region31: #{tpu_custom_call.1} parent=1 // pred_check_branch
      %106 = sbr.rel (0) target = $region33
    $region32: #{tpu_custom_call.1} parent=1 // pred_region
      %108 = vsyncadd [#allocation13], 0
      %s109 = sshll.u32 %s7, 4
      %s110 = int_to_ptr.hbm [resolvable:$true] %s109
      %s111 = sshll.u32 [#allocation14], 4
      %s112 = int_to_ptr.vmem [resolvable:$true] %s111
      %117 = dma.hbm_to_vmem [thread:$0]  %s110, 1024, %s112, [#allocation13], 128, 128, 8
    $region33: #{tpu_custom_call.1} parent=1 // pred_fallthru
      _
    // Predicated region
    $region34: #{tpu_custom_call.1} parent=1 // pred_check
      _
    $region35: #{tpu_custom_call.1} parent=1 // pred_check_branch
      %119 = sbr.rel (0) target = $region37
    $region36: #{tpu_custom_call.1} parent=1 // pred_region
      _
    $region37: #{tpu_custom_call.1} parent=1 // pred_fallthru
      _
    // Predicated region
    $region38: #{tpu_custom_call.1} parent=1 // pred_check
      _
    $region39: #{tpu_custom_call.1} parent=1 // pred_check_branch
      %121 = sbr.rel (0) target = $region41
    $region40: #{tpu_custom_call.1} parent=1 // pred_region
      _
    $region41: #{tpu_custom_call.1} parent=1 // pred_fallthru
      _
    // Predicated region
    $region42: #{tpu_custom_call.1} parent=1 // pred_check
      _
    $region43: #{tpu_custom_call.1} parent=1 // pred_check_branch
      %123 = sbr.rel (0) target = $region45
    $region44: #{tpu_custom_call.1} parent=1 // pred_region
      _
    $region45: #{tpu_custom_call.1} parent=1 // pred_fallthru
      _
    // Predicated region
    $region46: #{tpu_custom_call.1} parent=1 // pred_check
      _
    $region47: #{tpu_custom_call.1} parent=1 // pred_check_branch
      %125 = sbr.rel (0) target = $region49
    $region48: #{tpu_custom_call.1} parent=1 // pred_region
      _
    $region49: #{tpu_custom_call.1} parent=1 // pred_fallthru
      _
    // Predicated region
    $region50: #{tpu_custom_call.1} parent=1 // pred_check
      _
    $region51: #{tpu_custom_call.1} parent=1 // pred_check_branch
      %127 = sbr.rel (0) target = $region53
    $region52: #{tpu_custom_call.1} parent=1 // pred_region
      _
    $region53: #{tpu_custom_call.1} parent=1 // pred_fallthru
      _
    // Predicated region
    $region54: #{tpu_custom_call.1} parent=1 // pred_check
      _
    $region55: #{tpu_custom_call.1} parent=1 // pred_check_branch
      %129 = sbr.rel (0) target = $region57
    $region56: #{tpu_custom_call.1} parent=1 // pred_region
      _
    $region57: #{tpu_custom_call.1} parent=1 // pred_fallthru
      _
    // Predicated region
    $region58: #{tpu_custom_call.1} parent=1 // pred_check
      _
    $region59: #{tpu_custom_call.1} parent=1 // pred_check_branch
      %131 = sbr.rel (0) target = $region61
    $region60: #{tpu_custom_call.1} parent=1 // pred_region
      _
    $region61: #{tpu_custom_call.1} parent=1 // pred_fallthru
      _
    // Predicated region
    $region62: #{tpu_custom_call.1} parent=1 // pred_check
      _
    $region63: #{tpu_custom_call.1} parent=1 // pred_check_branch
      %133 = sbr.rel (0) target = $region65
    $region64: #{tpu_custom_call.1} parent=1 // pred_region
      %135 = dma.done [#allocation4], 512
    $region65: #{tpu_custom_call.1} parent=1 // pred_fallthru
      _
    // Predicated region
    $region66: #{tpu_custom_call.1} parent=1 // pred_check
      _
    $region67: #{tpu_custom_call.1} parent=1 // pred_check_branch
      %137 = sbr.rel (0) target = $region69
    $region68: #{tpu_custom_call.1} parent=1 // pred_region
      %139 = dma.done [#allocation7], 256
    $region69: #{tpu_custom_call.1} parent=1 // pred_fallthru
      _
    // Predicated region
    $region70: #{tpu_custom_call.1} parent=1 // pred_check
      _
    $region71: #{tpu_custom_call.1} parent=1 // pred_check_branch
      %141 = sbr.rel (0) target = $region73
    $region72: #{tpu_custom_call.1} parent=1 // pred_region
      %143 = dma.done [#allocation7], 256
    $region73: #{tpu_custom_call.1} parent=1 // pred_fallthru
      _
    // Predicated region
    $region74: #{tpu_custom_call.1} parent=1 // pred_check
      _
    $region75: #{tpu_custom_call.1} parent=1 // pred_check_branch
      %145 = sbr.rel (0) target = $region77
    $region76: #{tpu_custom_call.1} parent=1 // pred_region
      %147 = dma.done [#allocation10], 3200
    $region77: #{tpu_custom_call.1} parent=1 // pred_fallthru
      _
    // Predicated region
    $region78: #{tpu_custom_call.1} parent=1 // pred_check
      _
    $region79: #{tpu_custom_call.1} parent=1 // pred_check_branch
      %149 = sbr.rel (0) target = $region81
    $region80: #{tpu_custom_call.1} parent=1 // pred_region
      %151 = dma.done [#allocation10], 128
    $region81: #{tpu_custom_call.1} parent=1 // pred_fallthru
      _
    // Predicated region
    $region82: #{tpu_custom_call.1} parent=1 // pred_check
      _
    $region83: #{tpu_custom_call.1} parent=1 // pred_check_branch
      %153 = sbr.rel (0) target = $region85
    $region84: #{tpu_custom_call.1} parent=1 // pred_region
      %155 = dma.done [#allocation13], 512
    $region85: #{tpu_custom_call.1} parent=1 // pred_fallthru
      _
    // Predicated region
    $region86: #{tpu_custom_call.1} parent=1 // pred_check
      _
    $region87: #{tpu_custom_call.1} parent=1 // pred_check_branch
      %157 = sbr.rel (0) target = $region89
    $region88: #{tpu_custom_call.1} parent=1 // pred_region
      %159 = dma.done [#allocation13], 1024
    $region89: #{tpu_custom_call.1} parent=1 // pred_fallthru
      _
    %v161 = vld [vmem:[#allocation3] sm:$0xff]
    %v162 = vld [vmem:[#allocation3 + $0x8] sm:$0xff]
    %v163 = vld [vmem:[#allocation3 + $0x10] sm:$0xff]
    %v164 = vld [vmem:[#allocation3 + $0x18] sm:$0xff]
    %v165 = vpack.c.bf16 %v163, %v161
    %v166 = vpack.c.bf16 %v164, %v162
    %v167 = vld [vmem:[#allocation9] sm:$0xff]
    %v168 = vld [vmem:[#allocation9 + $0x8] sm:$0xff]
    %v169 = vld [vmem:[#allocation9 + $0x10] sm:$0xff]
    %v170 = vld [vmem:[#allocation9 + $0x18] sm:$0xff]
    %v171 = vld [vmem:[#allocation9 + $0x20] sm:$0xff]
    %v172 = vld [vmem:[#allocation9 + $0x28] sm:$0xff]
    %v173 = vld [vmem:[#allocation9 + $0x30] sm:$0xff]
    %v174 = vld [vmem:[#allocation9 + $0x38] sm:$0xff]
    %v175 = vld [vmem:[#allocation9 + $0x40] sm:$0xff]
    %v176 = vld [vmem:[#allocation9 + $0x48] sm:$0xff]
    %v177 = vld [vmem:[#allocation9 + $0x50] sm:$0xff]
    %v178 = vld [vmem:[#allocation9 + $0x58] sm:$0xff]
    %v179 = vld [vmem:[#allocation9 + $0x60] sm:$0xff]
    %v180 = vld [vmem:[#allocation9 + $0x68] sm:$0xff]
    %v181 = vld [vmem:[#allocation9 + $0x70] sm:$0xff]
    %v182 = vld [vmem:[#allocation9 + $0x78] sm:$0xff]
    %v183 = vld [vmem:[#allocation9 + $0x80] sm:$0xff]
    %v184 = vld [vmem:[#allocation9 + $0x88] sm:$0xff]
    %v185 = vld [vmem:[#allocation9 + $0x90] sm:$0xff]
    %v186 = vld [vmem:[#allocation9 + $0x98] sm:$0xff]
    %v187 = vld [vmem:[#allocation9 + $0xa0] sm:$0xff]
    %v188 = vld [vmem:[#allocation9 + $0xa8] sm:$0xff]
    %v189 = vld [vmem:[#allocation9 + $0xb0] sm:$0xff]
    %v190 = vld [vmem:[#allocation9 + $0xb8] sm:$0xff]
    %v191 = vld [vmem:[#allocation9 + $0xc0] sm:$0xff]
    %v192 = vld [vmem:[%s1] sm:$0xff]
    %v193 = vld [vmem:[%s1 + $0x8] sm:$0xff]
    %v194 = vpack.c.bf16 %v193, %v192
    %v195 = vld [vmem:[#allocation11] sm:$0x77]
    %v197 = vunpack.c.l.b16 %v195
    %v198 = vunpack.c.h.b16 %v195
    %v199 = vpack.c.b16 %v197, %v197
    %v200 = vpack.c.b16 %v198, %v198
    %vm201 = vcmask 39936
    %v203 = vsel %vm201, %v194, 0
    %vm205 = vcmask 1041408
    %vm206 = vcmask 1042432
    %v207 = vsel %vm205, 4294967295, 65535
    %v208 = vsel %vm206, %v207, 0
    %v210 = vand.u32 %v199, %v208
    %v213 = vand.u32 %v200, %v208
    %215 = vmatpush.bf16.msra.mxu0 0
    %216 = vmatpush.bf16.msra.mxu0 0
    %217 = vmatpush.bf16.msra.mxu0 0
    %218 = vmatpush.bf16.msra.mxu0 0
    %219 = vmatpush.bf16.msra.mxu0 0
    %220 = vmatpush.bf16.msra.mxu0 0
    %221 = vmatpush.bf16.msra.mxu0 0
    %222 = vmatpush.bf16.msra.mxu0 %v210
    %223 = vmatmul.bf16.gmra.mxu0 %v203
    %v224 = vpop.f32.mrf.mxu0
    %v225 = vadd.f32 0.0, %v224
    %v226 = vpop.f32.mrf.mxu0
    %v227 = vadd.f32 0.0, %v226
    %228 = vdwg.mxu0
    %229 = vmatpush.bf16.msra.mxu0 0
    %230 = vmatpush.bf16.msra.mxu0 0
    %231 = vmatpush.bf16.msra.mxu0 0
    %232 = vmatpush.bf16.msra.mxu0 0
    %233 = vmatpush.bf16.msra.mxu0 0
    %234 = vmatpush.bf16.msra.mxu0 0
    %235 = vmatpush.bf16.msra.mxu0 0
    %236 = vmatpush.bf16.msra.mxu0 %v213
    %237 = vmatmul.bf16.gmra.mxu0 %v203
    %v238 = vpop.f32.mrf.mxu0
    %v239 = vadd.f32 0.0, %v238
    %v240 = vpop.f32.mrf.mxu0
    %v241 = vadd.f32 0.0, %v240
    %242 = vdwg.mxu0
    %v268 = vunpack.c.l.b16 %v167
    %v269 = vunpack.c.h.b16 %v167
    %v270 = vunpack.c.l.b16 %v168
    %v271 = vunpack.c.h.b16 %v168
    %v272 = vunpack.c.l.b16 %v169
    %v273 = vunpack.c.h.b16 %v169
    %v274 = vunpack.c.l.b16 %v170
    %v275 = vunpack.c.h.b16 %v170
    %v276 = vunpack.c.l.b16 %v171
    %v277 = vunpack.c.h.b16 %v171
    %v278 = vunpack.c.l.b16 %v172
    %v279 = vunpack.c.h.b16 %v172
    %v280 = vunpack.c.l.b16 %v173
    %v281 = vunpack.c.h.b16 %v173
    %v282 = vunpack.c.l.b16 %v174
    %v283 = vunpack.c.h.b16 %v174
    %v284 = vunpack.c.l.b16 %v175
    %v285 = vunpack.c.h.b16 %v175
    %v286 = vunpack.c.l.b16 %v176
    %v287 = vunpack.c.h.b16 %v176
    %v288 = vunpack.c.l.b16 %v177
    %v289 = vunpack.c.h.b16 %v177
    %v290 = vunpack.c.l.b16 %v178
    %v291 = vunpack.c.h.b16 %v178
    %v292 = vunpack.c.l.b16 %v179
    %v293 = vunpack.c.h.b16 %v179
    %v294 = vunpack.c.l.b16 %v180
    %v295 = vunpack.c.h.b16 %v180
    %v296 = vunpack.c.l.b16 %v181
    %v297 = vunpack.c.h.b16 %v181
    %v298 = vunpack.c.l.b16 %v182
    %v299 = vunpack.c.h.b16 %v182
    %v300 = vunpack.c.l.b16 %v183
    %v301 = vunpack.c.h.b16 %v183
    %v302 = vunpack.c.l.b16 %v184
    %v303 = vunpack.c.h.b16 %v184
    %v304 = vunpack.c.l.b16 %v185
    %v305 = vunpack.c.h.b16 %v185
    %v306 = vunpack.c.l.b16 %v186
    %v307 = vunpack.c.h.b16 %v186
    %v308 = vunpack.c.l.b16 %v187
    %v309 = vunpack.c.h.b16 %v187
    %v310 = vunpack.c.l.b16 %v188
    %v311 = vunpack.c.h.b16 %v188
    %v312 = vunpack.c.l.b16 %v189
    %v313 = vunpack.c.h.b16 %v189
    %v314 = vunpack.c.l.b16 %v190
    %v315 = vunpack.c.h.b16 %v190
    %v316 = vunpack.c.l.b16 %v191
    %v317 = vunpack.c.h.b16 %v191
    %v318 = vpack.c.b16 %v270, %v268
    %v319 = vpack.c.b16 %v271, %v269
    %v320 = vpack.c.b16 %v274, %v272
    %v321 = vpack.c.b16 %v275, %v273
    %v322 = vpack.c.b16 %v278, %v276
    %v323 = vpack.c.b16 %v279, %v277
    %v324 = vpack.c.b16 %v282, %v280
    %v325 = vpack.c.b16 %v283, %v281
    %v326 = vpack.c.b16 %v286, %v284
    %v327 = vpack.c.b16 %v287, %v285
    %v328 = vpack.c.b16 %v290, %v288
    %v329 = vpack.c.b16 %v291, %v289
    %v330 = vpack.c.b16 %v294, %v292
    %v331 = vpack.c.b16 %v295, %v293
    %v332 = vpack.c.b16 %v298, %v296
    %v333 = vpack.c.b16 %v299, %v297
    %v334 = vpack.c.b16 %v302, %v300
    %v335 = vpack.c.b16 %v303, %v301
    %v336 = vpack.c.b16 %v306, %v304
    %v337 = vpack.c.b16 %v307, %v305
    %v338 = vpack.c.b16 %v310, %v308
    %v339 = vpack.c.b16 %v311, %v309
    %v340 = vpack.c.b16 %v314, %v312
    %v341 = vpack.c.b16 %v315, %v313
    %v342 = vpack.c.b16 %v316, %v316
    %v343 = vpack.c.b16 %v317, %v317
    %vm368 = vcmask 588800
    %v370 = vsel %vm368, %v166, 0
    %vm372 = vcmask 1043456
    %v374 = vsel %vm372, %v342, 0
    %v377 = vsel %vm372, %v343, 0
    %379 = vmatpush.bf16.msra.mxu0 %v332
    %380 = vmatpush.bf16.msra.mxu0 %v330
    %381 = vmatpush.bf16.msra.mxu0 %v328
    %382 = vmatpush.bf16.msra.mxu0 %v326
    %383 = vmatpush.bf16.msra.mxu0 %v324
    %384 = vmatpush.bf16.msra.mxu0 %v322
    %385 = vmatpush.bf16.msra.mxu0 %v320
    %386 = vmatpush.bf16.msra.mxu0 %v318
    %387 = vmatmul.bf16.gmra.mxu0 %v165
    %v388 = vpop.f32.mrf.mxu0
    %v389 = vadd.f32 %v225, %v388
    %v390 = vpop.f32.mrf.mxu0
    %v391 = vadd.f32 %v227, %v390
    %392 = vdwg.mxu0
    %393 = vmatpush.bf16.msra.mxu0 0
    %394 = vmatpush.bf16.msra.mxu0 0
    %395 = vmatpush.bf16.msra.mxu0 0
    %396 = vmatpush.bf16.msra.mxu0 %v374
    %397 = vmatpush.bf16.msra.mxu0 %v340
    %398 = vmatpush.bf16.msra.mxu0 %v338
    %399 = vmatpush.bf16.msra.mxu0 %v336
    %400 = vmatpush.bf16.msra.mxu0 %v334
    %401 = vmatmul.bf16.gmra.mxu0 %v370
    %v402 = vpop.f32.mrf.mxu0
    %v403 = vadd.f32 %v389, %v402
    %v404 = vpop.f32.mrf.mxu0
    %v405 = vadd.f32 %v391, %v404
    %406 = vdwg.mxu0
    %407 = vmatpush.bf16.msra.mxu0 %v333
    %408 = vmatpush.bf16.msra.mxu0 %v331
    %409 = vmatpush.bf16.msra.mxu0 %v329
    %410 = vmatpush.bf16.msra.mxu0 %v327
    %411 = vmatpush.bf16.msra.mxu0 %v325
    %412 = vmatpush.bf16.msra.mxu0 %v323
    %413 = vmatpush.bf16.msra.mxu0 %v321
    %414 = vmatpush.bf16.msra.mxu0 %v319
    %415 = vmatmul.bf16.gmra.mxu0 %v165
    %v416 = vpop.f32.mrf.mxu0
    %v417 = vadd.f32 %v239, %v416
    %v418 = vpop.f32.mrf.mxu0
    %v419 = vadd.f32 %v241, %v418
    %420 = vdwg.mxu0
    %421 = vmatpush.bf16.msra.mxu0 0
    %422 = vmatpush.bf16.msra.mxu0 0
    %423 = vmatpush.bf16.msra.mxu0 0
    %424 = vmatpush.bf16.msra.mxu0 %v377
    %425 = vmatpush.bf16.msra.mxu0 %v341
    %426 = vmatpush.bf16.msra.mxu0 %v339
    %427 = vmatpush.bf16.msra.mxu0 %v337
    %428 = vmatpush.bf16.msra.mxu0 %v335
    %429 = vmatmul.bf16.gmra.mxu0 %v370
    %v430 = vpop.f32.mrf.mxu0
    %v431 = vadd.f32 %v417, %v430
    %v432 = vpop.f32.mrf.mxu0
    %v433 = vadd.f32 %v419, %v432
    %434 = vdwg.mxu0
    %v435 = vld [vmem:[#allocation6] sm:$0xff]
    %v436 = vld [vmem:[#allocation6 + $0x8] sm:$0xff]
    %v437 = vpack.c.bf16 %v436, %v435
    %v438 = vld [vmem:[#allocation12] sm:$0xff]
    %v439 = vld [vmem:[#allocation12 + $0x8] sm:$0xff]
    %v440 = vld [vmem:[#allocation12 + $0x10] sm:$0xff]
    %v441 = vld [vmem:[#allocation12 + $0x18] sm:$0xff]
    %v446 = vunpack.c.l.b16 %v438
    %v447 = vunpack.c.h.b16 %v438
    %v448 = vunpack.c.l.b16 %v439
    %v449 = vunpack.c.h.b16 %v439
    %v450 = vunpack.c.l.b16 %v440
    %v451 = vunpack.c.h.b16 %v440
    %v452 = vunpack.c.l.b16 %v441
    %v453 = vunpack.c.h.b16 %v441
    %v454 = vpack.c.b16 %v448, %v446
    %v455 = vpack.c.b16 %v449, %v447
    %v456 = vpack.c.b16 %v452, %v450
    %v457 = vpack.c.b16 %v453, %v451
    %vm462 = vcmask 261120
    %v464 = vsel %vm462, %v437, 0
    %466 = vmatpush.bf16.msra.mxu0 0
    %467 = vmatpush.bf16.msra.mxu0 0
    %468 = vmatpush.bf16.msra.mxu0 0
    %469 = vmatpush.bf16.msra.mxu0 0
    %470 = vmatpush.bf16.msra.mxu0 0
    %471 = vmatpush.bf16.msra.mxu0 0
    %472 = vmatpush.bf16.msra.mxu0 %v456
    %473 = vmatpush.bf16.msra.mxu0 %v454
    %474 = vmatmul.bf16.gmra.mxu0 %v464
    %v475 = vpop.f32.mrf.mxu0
    %v476 = vadd.f32 0.0, %v475
    %v477 = vpop.f32.mrf.mxu0
    %v478 = vadd.f32 0.0, %v477
    %479 = vdwg.mxu0
    %480 = vmatpush.bf16.msra.mxu0 0
    %481 = vmatpush.bf16.msra.mxu0 0
    %482 = vmatpush.bf16.msra.mxu0 0
    %483 = vmatpush.bf16.msra.mxu0 0
    %484 = vmatpush.bf16.msra.mxu0 0
    %485 = vmatpush.bf16.msra.mxu0 0
    %486 = vmatpush.bf16.msra.mxu0 %v457
    %487 = vmatpush.bf16.msra.mxu0 %v455
    %488 = vmatmul.bf16.gmra.mxu0 %v464
    %v489 = vpop.f32.mrf.mxu0
    %v490 = vadd.f32 0.0, %v489
    %v491 = vpop.f32.mrf.mxu0
    %v492 = vadd.f32 0.0, %v491
    %493 = vdwg.mxu0
    %v494 = vadd.f32 %v403, %v476
    %v495 = vadd.f32 %v431, %v490
    %v496 = vadd.f32 %v405, %v478
    %v497 = vadd.f32 %v433, %v492
    %v498 = vld [vmem:[#allocation8] sm:$0xff]
    %v499 = vld [vmem:[#allocation8 + $0x8] sm:$0xff]
    %v500 = vpack.c.bf16 %v499, %v498
    %v501 = vld [vmem:[#allocation14] sm:$0xff]
    %v502 = vld [vmem:[#allocation14 + $0x8] sm:$0xff]
    %v503 = vld [vmem:[#allocation14 + $0x10] sm:$0xff]
    %v504 = vld [vmem:[#allocation14 + $0x18] sm:$0xff]
    %v505 = vld [vmem:[#allocation14 + $0x20] sm:$0xff]
    %v506 = vld [vmem:[#allocation14 + $0x28] sm:$0xff]
    %v507 = vld [vmem:[#allocation14 + $0x30] sm:$0xff]
    %v508 = vld [vmem:[#allocation14 + $0x38] sm:$0xff]
    %v517 = vunpack.c.l.b16 %v501
    %v518 = vunpack.c.h.b16 %v501
    %v519 = vunpack.c.l.b16 %v502
    %v520 = vunpack.c.h.b16 %v502
    %v521 = vunpack.c.l.b16 %v503
    %v522 = vunpack.c.h.b16 %v503
    %v523 = vunpack.c.l.b16 %v504
    %v524 = vunpack.c.h.b16 %v504
    %v525 = vunpack.c.l.b16 %v505
    %v526 = vunpack.c.h.b16 %v505
    %v527 = vunpack.c.l.b16 %v506
    %v528 = vunpack.c.h.b16 %v506
    %v529 = vunpack.c.l.b16 %v507
    %v530 = vunpack.c.h.b16 %v507
    %v531 = vunpack.c.l.b16 %v508
    %v532 = vunpack.c.h.b16 %v508
    %v533 = vpack.c.b16 %v519, %v517
    %v534 = vpack.c.b16 %v520, %v518
    %v535 = vpack.c.b16 %v523, %v521
    %v536 = vpack.c.b16 %v524, %v522
    %v537 = vpack.c.b16 %v527, %v525
    %v538 = vpack.c.b16 %v528, %v526
    %v539 = vpack.c.b16 %v531, %v529
    %v540 = vpack.c.b16 %v532, %v530
    %vm549 = vcmask 523264
    %v551 = vsel %vm549, %v500, 0
    %553 = vmatpush.bf16.msra.mxu0 0
    %554 = vmatpush.bf16.msra.mxu0 0
    %555 = vmatpush.bf16.msra.mxu0 0
    %556 = vmatpush.bf16.msra.mxu0 0
    %557 = vmatpush.bf16.msra.mxu0 %v539
    %558 = vmatpush.bf16.msra.mxu0 %v537
    %559 = vmatpush.bf16.msra.mxu0 %v535
    %560 = vmatpush.bf16.msra.mxu0 %v533
    %561 = vmatmul.bf16.gmra.mxu0 %v551
    %v562 = vpop.f32.mrf.mxu0
    %v563 = vadd.f32 0.0, %v562
    %v564 = vpop.f32.mrf.mxu0
    %v565 = vadd.f32 0.0, %v564
    %566 = vdwg.mxu0
    %567 = vmatpush.bf16.msra.mxu0 0
    %568 = vmatpush.bf16.msra.mxu0 0
    %569 = vmatpush.bf16.msra.mxu0 0
    %570 = vmatpush.bf16.msra.mxu0 0
    %571 = vmatpush.bf16.msra.mxu0 %v540
    %572 = vmatpush.bf16.msra.mxu0 %v538
    %573 = vmatpush.bf16.msra.mxu0 %v536
    %574 = vmatpush.bf16.msra.mxu0 %v534
    %575 = vmatmul.bf16.gmra.mxu0 %v551
    %v576 = vpop.f32.mrf.mxu0
    %v577 = vadd.f32 0.0, %v576
    %v578 = vpop.f32.mrf.mxu0
    %v579 = vadd.f32 0.0, %v578
    %580 = vdwg.mxu0
    %v581 = vadd.f32 %v494, %v563
    %v582 = vadd.f32 %v495, %v577
    %v583 = vadd.f32 %v496, %v565
    %v584 = vadd.f32 %v497, %v579
    %v585 = vld [vmem:[%s8] sm:$0x3]
    %v587 = vperm.slane %v585, 0
    %v588 = vperm.slane %v585, 1
    %v591 = vadd.f32 %v581, %v587
    %v592 = vadd.f32 %v582, %v588
    %v593 = vadd.f32 %v583, %v587
    %v594 = vadd.f32 %v584, %v588
    %v595 = vmax.f32 %v591, 0.0
    %v596 = vmax.f32 %v592, 0.0
    %v597 = vmax.f32 %v593, 0.0
    %v598 = vmax.f32 %v594, 0.0
    %v599 = vpack.c.bf16 %v597, %v595
    %v600 = vpack.c.bf16 %v598, %v596
    %v601 = vld [vmem:[%s9] sm:$0xf]
    %v602 = vld [vmem:[%s9 + $0x4] sm:$0xf]
    %v603 = vld [vmem:[%s9 + $0x8] sm:$0xf]
    %v604 = vld [vmem:[%s9 + $0xc] sm:$0xf]
    %v605 = vld [vmem:[%s9 + $0x10] sm:$0xf]
    %v606 = vld [vmem:[%s9 + $0x14] sm:$0xf]
    %v607 = vld [vmem:[%s9 + $0x18] sm:$0xf]
    %v608 = vld [vmem:[%s9 + $0x1c] sm:$0xf]
    %v609 = vld [vmem:[%s9 + $0x20] sm:$0xf]
    %v610 = vld [vmem:[%s9 + $0x24] sm:$0xf]
    %v611 = vld [vmem:[%s9 + $0x28] sm:$0xf]
    %v612 = vld [vmem:[%s9 + $0x2c] sm:$0xf]
    %v613 = vld [vmem:[%s9 + $0x30] sm:$0xf]
    %v614 = vld [vmem:[%s9 + $0x34] sm:$0xf]
    %v615 = vld [vmem:[%s9 + $0x38] sm:$0xf]
    %v616 = vld [vmem:[%s9 + $0x3c] sm:$0xf]
    %v617 = vld [vmem:[%s9 + $0x40] sm:$0xf]
    %v618 = vld [vmem:[%s9 + $0x44] sm:$0xf]
    %v619 = vld [vmem:[%s9 + $0x48] sm:$0xf]
    %v620 = vld [vmem:[%s9 + $0x4c] sm:$0xf]
    %v621 = vld [vmem:[%s9 + $0x50] sm:$0xf]
    %v622 = vld [vmem:[%s9 + $0x54] sm:$0xf]
    %v623 = vld [vmem:[%s9 + $0x58] sm:$0xf]
    %v624 = vld [vmem:[%s9 + $0x5c] sm:$0xf]
    %v625 = vld [vmem:[%s9 + $0x60] sm:$0xf]
    %v626 = vld [vmem:[%s9 + $0x64] sm:$0xf]
    %v627 = vld [vmem:[%s9 + $0x68] sm:$0xf]
    %v628 = vld [vmem:[%s9 + $0x6c] sm:$0xf]
    %v629 = vld [vmem:[%s9 + $0x70] sm:$0xf]
    %v630 = vld [vmem:[%s9 + $0x74] sm:$0xf]
    %v631 = vld [vmem:[%s9 + $0x78] sm:$0xf]
    %v632 = vld [vmem:[%s9 + $0x7c] sm:$0xf]
    %v633 = vld [vmem:[%s10] sm:$0x1]
    %v635 = vperm.slane %v633, 0
    %v669 = vunpack.c.l.b16 %v601
    %v670 = vunpack.c.l.b16 %v602
    %v671 = vunpack.c.l.b16 %v603
    %v672 = vunpack.c.l.b16 %v604
    %v673 = vunpack.c.l.b16 %v605
    %v674 = vunpack.c.l.b16 %v606
    %v675 = vunpack.c.l.b16 %v607
    %v676 = vunpack.c.l.b16 %v608
    %v677 = vunpack.c.l.b16 %v609
    %v678 = vunpack.c.l.b16 %v610
    %v679 = vunpack.c.l.b16 %v611
    %v680 = vunpack.c.l.b16 %v612
    %v681 = vunpack.c.l.b16 %v613
    %v682 = vunpack.c.l.b16 %v614
    %v683 = vunpack.c.l.b16 %v615
    %v684 = vunpack.c.l.b16 %v616
    %v685 = vunpack.c.l.b16 %v617
    %v686 = vunpack.c.l.b16 %v618
    %v687 = vunpack.c.l.b16 %v619
    %v688 = vunpack.c.l.b16 %v620
    %v689 = vunpack.c.l.b16 %v621
    %v690 = vunpack.c.l.b16 %v622
    %v691 = vunpack.c.l.b16 %v623
    %v692 = vunpack.c.l.b16 %v624
    %v693 = vunpack.c.l.b16 %v625
    %v694 = vunpack.c.l.b16 %v626
    %v695 = vunpack.c.l.b16 %v627
    %v696 = vunpack.c.l.b16 %v628
    %v697 = vunpack.c.l.b16 %v629
    %v698 = vunpack.c.l.b16 %v630
    %v699 = vunpack.c.l.b16 %v631
    %v700 = vunpack.c.l.b16 %v632
    %v701 = vpack.c.b16 %v670, %v669
    %v702 = vpack.c.b16 %v672, %v671
    %v703 = vpack.c.b16 %v674, %v673
    %v704 = vpack.c.b16 %v676, %v675
    %v705 = vpack.c.b16 %v678, %v677
    %v706 = vpack.c.b16 %v680, %v679
    %v707 = vpack.c.b16 %v682, %v681
    %v708 = vpack.c.b16 %v684, %v683
    %v709 = vpack.c.b16 %v686, %v685
    %v710 = vpack.c.b16 %v688, %v687
    %v711 = vpack.c.b16 %v690, %v689
    %v712 = vpack.c.b16 %v692, %v691
    %v713 = vpack.c.b16 %v694, %v693
    %v714 = vpack.c.b16 %v696, %v695
    %v715 = vpack.c.b16 %v698, %v697
    %v716 = vpack.c.b16 %v700, %v699
    %733 = vmatpush.bf16.msra.mxu0 %v708
    %734 = vmatpush.bf16.msra.mxu0 %v707
    %735 = vmatpush.bf16.msra.mxu0 %v706
    %736 = vmatpush.bf16.msra.mxu0 %v705
    %737 = vmatpush.bf16.msra.mxu0 %v704
    %738 = vmatpush.bf16.msra.mxu0 %v703
    %739 = vmatpush.bf16.msra.mxu0 %v702
    %740 = vmatpush.bf16.msra.mxu0 %v701
    %741 = vmatmul.bf16.gmra.mxu0 %v599
    %v742 = vpop.f32.mrf.mxu0
    %v743 = vadd.f32 %v635, %v742
    %v744 = vpop.f32.mrf.mxu0
    %v745 = vadd.f32 %v635, %v744
    %746 = vdwg.mxu0
    %747 = vmatpush.bf16.msra.mxu0 %v716
    %748 = vmatpush.bf16.msra.mxu0 %v715
    %749 = vmatpush.bf16.msra.mxu0 %v714
    %750 = vmatpush.bf16.msra.mxu0 %v713
    %751 = vmatpush.bf16.msra.mxu0 %v712
    %752 = vmatpush.bf16.msra.mxu0 %v711
    %753 = vmatpush.bf16.msra.mxu0 %v710
    %754 = vmatpush.bf16.msra.mxu0 %v709
    %755 = vmatmul.bf16.gmra.mxu0 %v600
    %v756 = vpop.f32.mrf.mxu0
    %v757 = vadd.f32 %v743, %v756
    %v758 = vpop.f32.mrf.mxu0
    %v759 = vadd.f32 %v745, %v758
    %760 = vdwg.mxu0
    %v761 = vmax.f32 %v757, 0.0
    %v762 = vmax.f32 %v759, 0.0
    %v763 = vpack.c.bf16 %v762, %v761
    %v764 = vld [vmem:[%s11] sm:$0xf]
    %v765 = vld [vmem:[%s11 + $0x4] sm:$0xf]
    %v766 = vld [vmem:[%s11 + $0x8] sm:$0xf]
    %v767 = vld [vmem:[%s11 + $0xc] sm:$0xf]
    %v768 = vld [vmem:[%s11 + $0x10] sm:$0xf]
    %v769 = vld [vmem:[%s11 + $0x14] sm:$0xf]
    %v770 = vld [vmem:[%s11 + $0x18] sm:$0xf]
    %v771 = vld [vmem:[%s11 + $0x1c] sm:$0xf]
    %v772 = vld [vmem:[%s11 + $0x20] sm:$0xf]
    %v773 = vld [vmem:[%s11 + $0x24] sm:$0xf]
    %v774 = vld [vmem:[%s11 + $0x28] sm:$0xf]
    %v775 = vld [vmem:[%s11 + $0x2c] sm:$0xf]
    %v776 = vld [vmem:[%s11 + $0x30] sm:$0xf]
    %v777 = vld [vmem:[%s11 + $0x34] sm:$0xf]
    %v778 = vld [vmem:[%s11 + $0x38] sm:$0xf]
    %v779 = vld [vmem:[%s11 + $0x3c] sm:$0xf]
    %v780 = vld [vmem:[%s12] sm:$0x1]
    %v782 = vperm.slane %v780, 0
    %v800 = vunpack.c.l.b16 %v764
    %v801 = vunpack.c.l.b16 %v765
    %v802 = vunpack.c.l.b16 %v766
    %v803 = vunpack.c.l.b16 %v767
    %v804 = vunpack.c.l.b16 %v768
    %v805 = vunpack.c.l.b16 %v769
    %v806 = vunpack.c.l.b16 %v770
    %v807 = vunpack.c.l.b16 %v771
    %v808 = vunpack.c.l.b16 %v772
    %v809 = vunpack.c.l.b16 %v773
    %v810 = vunpack.c.l.b16 %v774
    %v811 = vunpack.c.l.b16 %v775
    %v812 = vunpack.c.l.b16 %v776
    %v813 = vunpack.c.l.b16 %v777
    %v814 = vunpack.c.l.b16 %v778
    %v815 = vunpack.c.l.b16 %v779
    %v816 = vpack.c.b16 %v801, %v800
    %v817 = vpack.c.b16 %v803, %v802
    %v818 = vpack.c.b16 %v805, %v804
    %v819 = vpack.c.b16 %v807, %v806
    %v820 = vpack.c.b16 %v809, %v808
    %v821 = vpack.c.b16 %v811, %v810
    %v822 = vpack.c.b16 %v813, %v812
    %v823 = vpack.c.b16 %v815, %v814
    %832 = vmatpush.bf16.msra.mxu0 %v823
    %833 = vmatpush.bf16.msra.mxu0 %v822
    %834 = vmatpush.bf16.msra.mxu0 %v821
    %835 = vmatpush.bf16.msra.mxu0 %v820
    %836 = vmatpush.bf16.msra.mxu0 %v819
    %837 = vmatpush.bf16.msra.mxu0 %v818
    %838 = vmatpush.bf16.msra.mxu0 %v817
    %839 = vmatpush.bf16.msra.mxu0 %v816
    %840 = vmatmul.bf16.gmra.mxu0 %v763
    %v841 = vpop.f32.mrf.mxu0
    %v842 = vadd.f32 %v782, %v841
    %v843 = vpop.f32.mrf.mxu0
    %v844 = vadd.f32 %v782, %v843
    %845 = vdwg.mxu0
    %v846 = vmax.f32 %v842, 0.0
    %v847 = vmax.f32 %v844, 0.0
    %v848 = vld [vmem:[%s13] sm:$0x1]
    %v850 = vperm.slane %v848, 0
    %v852 = vmul.f32 %v846, %v850
    %v853 = vmul.f32 %v847, %v850
    %v854 = vsel %vm549, %v852, 0.0
    %855 = vadd.xlane.f32.xlu0 %v854
    %v856 = vpop.xlane.xlu0 %855
    %v857 = vsel %vm549, %v853, 0.0
    %858 = vadd.xlane.f32.xlu0 %v857
    %v859 = vpop.xlane.xlu0 %858
    %v860 = vld [vmem:[#allocation2] sm:$0x1]
    %862 = vset.pattern.permute.xlu0 0
    %863 = vperm.xlu0 %862, %v860
    %v864 = vpop.permute.xlu0 %863
    %v866 = vperm.slane %v864, 0
    %v867 = vadd.f32 %v856, %v866
    %v868 = vadd.f32 %v859, %v866
    %v871 = vlaneseq
    %v872 = vand.u32 %v871, 127
    %v873 = vperm.slane %v867, %v872
    %v874 = vadd.s32 %v872, 4294967288
    %v875 = vperm.slane %v868, %v874
    %vm876 = vcmask 130112
    %v877 = vsel %vm876, %v875, %v873
    %vm879 = vcmask 122880
    %880 = vst.msk [vmem:[#allocation15] sm:$0x1] %vm879, %v877
    // Predicated region
    $region90: #{tpu_custom_call.1} parent=1 // pred_check
      _
    $region91: #{tpu_custom_call.1} parent=1 // pred_check_branch
      %882 = sbr.rel (0) target = $region93
    $region92: #{tpu_custom_call.1} parent=1 // pred_region
      %884 = vsyncadd [#allocation5], 0
      %s886 = sshll.u32 [#allocation15], 4
      %s887 = int_to_ptr.vmem [resolvable:$true] %s886
      %s888 = sshll.u32 %s15, 4
      %s889 = int_to_ptr.hbm [resolvable:$true] %s888
      %891 = dma.vmem_to_hbm [thread:$0]  %s887, 16, %s889, [#allocation5]
    $region93: #{tpu_custom_call.1} parent=1 // pred_fallthru
      _
    // Predicated region
    $region94: #{tpu_custom_call.1} parent=1 // pred_check
      _
    $region95: #{tpu_custom_call.1} parent=1 // pred_check_branch
      %893 = sbr.rel (0) target = $region97
    $region96: #{tpu_custom_call.1} parent=1 // pred_region
      %895 = dma.done [#allocation5], 16
    $region97: #{tpu_custom_call.1} parent=1 // pred_fallthru
      _
    %896 = vsyncpa [#allocation4], 1
    %897 = vsyncpa [#allocation7], 1
    %898 = vsyncpa [#allocation10], 1
    %899 = vsyncpa [#allocation13], 1
    %900 = vsyncpa [#allocation5], 1

</llo_original>
